<compile_context>
chip_gen: v5e
topology: v5e:2x2
jax: 0.10.0
libtpu: 0.0.40
codegen_flags: <defaults>
</compile_context>

<pallas_src>
import functools
import math

import jax
import jax.numpy as jnp
from jax.experimental import pallas as pl
from jax.experimental.pallas import tpu as pltpu  # noqa: F401

# ---------------- model hyper-parameters (small, deterministic) ----------------
BATCH = 2
SEQ = 8             # context_len
EMBED = 32          # embed_dim
N_HEADS = 4
HEAD_DIM = EMBED // N_HEADS
HIDDEN = 4 * EMBED  # FeedForward hidden_dim (embed_dim * 4)
EPS = 1e-5
NEG_INF = -1e30     # finite "minus infinity"


def _layer_norm(x, gamma, beta):
    mean = jnp.mean(x, axis=-1, keepdims=True)
    xc = x - mean
    var = jnp.mean(xc * xc, axis=-1, keepdims=True)          # unbiased=False
    return gamma * (xc * jax.lax.rsqrt(var + EPS)) + beta    # rsqrt -> EUP slot


def _gelu(x):
    # same tanh approximation as the PyTorch GELU module
    c = math.sqrt(2.0 / math.pi)
    return 0.5 * x * (1.0 + jnp.tanh(c * (x + 0.044715 * x * x * x)))


def transformer_block_kernel(
    x_ref,            # (B*S, E)
    wqkv_ref,         # (B*H, E, 3*D)  per-(batch,head) fused q|k|v projection
    wo_ref,           # (B*H, D, E)    head-split output projection
    bo_ref,           # (1, E)
    w1_ref, b1_ref,   # (E, HID), (1, HID)
    w2_ref, b2_ref,   # (HID, E), (1, E)
    g1_ref, s1_ref,   # (1, E) norm1 scale/shift
    g2_ref, s2_ref,   # (1, E) norm2 scale/shift
    o_ref,            # (B*S, E)
    *, batch, seq, n_heads,
):
    B, S, H = batch, seq, n_heads
    x = x_ref[...].astype(jnp.float32)        # (B*S, E)
    E = x.shape[-1]
    D = E // H
    G = B * H

    # ---------------- norm1 + causal multi-head attention + residual ----------------
    skip = x
    xn = _layer_norm(x, g1_ref[...], s1_ref[...])

    # Group activations per (batch, head): leading-batch layout only (no minor-dim
    # transposes). Group g = b*H + h sees the rows of batch b and its own head's
    # slice of the fused QKV weight.
    xn_g = jnp.broadcast_to(xn.reshape(B, 1, S, E), (B, H, S, E)).reshape(G, S, E)
    qkv = jnp.einsum("gse,gef->gsf", xn_g, wqkv_ref[...],
                     preferred_element_type=jnp.float32)          # (G, S, 3D)
    q = qkv[:, :, :D]
    k = qkv[:, :, D:2 * D]
    v = qkv[:, :, 2 * D:]

    # causal mask (built once -- single kernel invocation)
    row = jax.lax.broadcasted_iota(jnp.int32, (S, S), 0)
    col = jax.lax.broadcasted_iota(jnp.int32, (S, S), 1)
    causal = (col <= row)[None, :, :]                             # (1, S, S)

    scale = 1.0 / math.sqrt(D)
    scores = jnp.einsum("gqd,gkd->gqk", q, k,
                        preferred_element_type=jnp.float32) * scale
    scores = jnp.where(causal, scores, NEG_INF)
    scores = scores - jnp.max(scores, axis=-1, keepdims=True)
    p = jnp.exp(scores)
    p = p * pl.reciprocal(jnp.sum(p, axis=-1, keepdims=True), approx=True)

    ctx = jnp.einsum("gqk,gkd->gqd", p, v,
                     preferred_element_type=jnp.float32)          # (G, S, D)
    # head merge folded into the (head-split) output projection, then reduce heads
    att = jnp.einsum("gsd,gde->gse", ctx, wo_ref[...],
                     preferred_element_type=jnp.float32)          # (G, S, E)
    att = att.reshape(B, H, S, E).sum(axis=1).reshape(B * S, E) + bo_ref[...]
    x = att + skip          # drop_shortcut == identity (eval)

    # -------- norm2 + feed-forward (Linear -> GELU -> Linear) + residual --------
    skip = x
    xn = _layer_norm(x, g2_ref[...], s2_ref[...])
    h1 = _gelu(jnp.dot(xn, w1_ref[...], preferred_element_type=jnp.float32) + b1_ref[...])
    ff = jnp.dot(h1, w2_ref[...], preferred_element_type=jnp.float32) + b2_ref[...]
    o_ref[...] = (ff + skip).astype(o_ref.dtype)


def transformer_block(x, params):
    """x: (B, S, E) float32.  params: dict of weights in x @ W layout."""
    B, S, E = x.shape
    H = N_HEADS
    D = E // H

    # ---- wrapper-side layout plumbing (pure XLA, done once per call) ----
    # fused head-grouped QKV weight: group g = b*H + h  ->  (E, [q_h | k_h | v_h])
    wq = params["wq"].reshape(E, H, D)
    wk = params["wk"].reshape(E, H, D)
    wv = params["wv"].reshape(E, H, D)
    wqkv = jnp.transpose(jnp.concatenate([wq, wk, wv], axis=-1), (1, 0, 2))   # (H, E, 3D)
    wqkv_g = jnp.broadcast_to(wqkv[None], (B, H, E, 3 * D)).reshape(B * H, E, 3 * D)
    # head-split output projection, tiled per (batch, head) group
    wo_g = jnp.broadcast_to(params["wo"].reshape(1, H, D, E),
                            (B, H, D, E)).reshape(B * H, D, E)

    kernel = functools.partial(transformer_block_kernel, batch=B, seq=S, n_heads=H)

    # Single grid-less invocation: whole problem + all weights resident in VMEM
    # (~60 KiB total), no per-grid-step pipeline overhead.
    out2d = pl.pallas_call(
        kernel,
        out_shape=jax.ShapeDtypeStruct((B * S, E), x.dtype),
    )(x.reshape(B * S, E), wqkv_g, wo_g, params["bo"],
      params["w1"], params["b1"], params["w2"], params["b2"],
      params["g1"], params["s1"], params["g2"], params["s2"])
    return out2d.reshape(B, S, E)


def transformer_block_reference(x, params):
    """Pure-JAX reference matching the PyTorch module (eval mode)."""
    B, S, E = x.shape
    H, D = N_HEADS, E // N_HEADS

    def ln(y, g, s):
        m = jnp.mean(y, axis=-1, keepdims=True)
        v = jnp.mean((y - m) ** 2, axis=-1, keepdims=True)
        return g * (y - m) / jnp.sqrt(v + EPS) + s

    skip = x
    xn = ln(x, params["g1"], params["s1"])
    q = (xn @ params["wq"]).reshape(B, S, H, D).transpose(0, 2, 1, 3)
    k = (xn @ params["wk"]).reshape(B, S, H, D).transpose(0, 2, 1, 3)
    v = (xn @ params["wv"]).reshape(B, S, H, D).transpose(0, 2, 1, 3)
    scores = jnp.einsum("bhqd,bhkd->bhqk", q, k) / math.sqrt(D)
    mask = jnp.tril(jnp.ones((S, S), dtype=bool))
    scores = jnp.where(mask, scores, -jnp.inf)
    p = jax.nn.softmax(scores, axis=-1)
    ctx = jnp.einsum("bhqk,bhkd->bhqd", p, v).transpose(0, 2, 1, 3).reshape(B, S, E)
    x = ctx @ params["wo"] + params["bo"] + skip
    skip = x
    xn = ln(x, params["g2"], params["s2"])
    h1 = xn @ params["w1"] + params["b1"]
    h1 = 0.5 * h1 * (1.0 + jnp.tanh(math.sqrt(2.0 / math.pi) * (h1 + 0.044715 * h1 ** 3)))
    return h1 @ params["w2"] + params["b2"] + skip


def init_params(key):
    ks = jax.random.split(key, 8)
    std = 0.02
    return {
        # attention projections, stored as (in, out) so kernel does x @ W
        "wq": jax.random.normal(ks[0], (EMBED, EMBED), jnp.float32) * std,
        "wk": jax.random.normal(ks[1], (EMBED, EMBED), jnp.float32) * std,
        "wv": jax.random.normal(ks[2], (EMBED, EMBED), jnp.float32) * std,
        "wo": jax.random.normal(ks[3], (EMBED, EMBED), jnp.float32) * std,
        "bo": jnp.zeros((1, EMBED), jnp.float32),
        # feed-forward
        "w1": jax.random.normal(ks[4], (EMBED, HIDDEN), jnp.float32) * std,
        "b1": jnp.zeros((1, HIDDEN), jnp.float32),
        "w2": jax.random.normal(ks[5], (HIDDEN, EMBED), jnp.float32) * std,
        "b2": jnp.zeros((1, EMBED), jnp.float32),
        # layer norms (scale=1, shift=0 as in the PyTorch __init__)
        "g1": jnp.ones((1, EMBED), jnp.float32),
        "s1": jnp.zeros((1, EMBED), jnp.float32),
        "g2": jnp.ones((1, EMBED), jnp.float32),
        "s2": jnp.zeros((1, EMBED), jnp.float32),
    }


if __name__ == "__main__":
    key = jax.random.PRNGKey(0)
    kx, kp = jax.random.split(key)
    x = jax.random.normal(kx, (BATCH, SEQ, EMBED), jnp.float32)
    params = init_params(kp)

    out = jax.block_until_ready(transformer_block(x, params))
    ref = transformer_block_reference(x, params)

    assert out.shape == (BATCH, SEQ, EMBED)
    assert bool(jnp.all(jnp.isfinite(out)))
    max_err = float(jnp.max(jnp.abs(out - ref)))
    assert max_err < 5e-3, f"kernel/reference mismatch: max abs err = {max_err}"
    print("KERNEL_OK")
</pallas_src>

<mosaic_0001>
module attributes {stable_mosaic.version = 11 : i64} {
  func.func @transformer_block_kernel(%arg0: memref<16x32xf32, #tpu.memory_space<vmem>>, %arg1: memref<8x32x24xf32, #tpu.memory_space<vmem>>, %arg2: memref<8x8x32xf32, #tpu.memory_space<vmem>>, %arg3: memref<1x32xf32, #tpu.memory_space<vmem>>, %arg4: memref<32x128xf32, #tpu.memory_space<vmem>>, %arg5: memref<1x128xf32, #tpu.memory_space<vmem>>, %arg6: memref<128x32xf32, #tpu.memory_space<vmem>>, %arg7: memref<1x32xf32, #tpu.memory_space<vmem>>, %arg8: memref<1x32xf32, #tpu.memory_space<vmem>>, %arg9: memref<1x32xf32, #tpu.memory_space<vmem>>, %arg10: memref<1x32xf32, #tpu.memory_space<vmem>>, %arg11: memref<1x32xf32, #tpu.memory_space<vmem>>, %arg12: memref<16x32xf32, #tpu.memory_space<vmem>>) attributes {dimension_semantics = [], scalar_prefetch = 0 : i64, scratch_operands = 0 : i64, tpu.core_type = #tpu.core_type<tc>} {
    %c0 = arith.constant 0 : index
    %c0_0 = arith.constant 0 : index
    %0 = vector.load %arg0[%c0, %c0_0] : memref<16x32xf32, #tpu.memory_space<vmem>>, vector<16x32xf32>
    %c0_1 = arith.constant 0 : index
    %c0_2 = arith.constant 0 : index
    %1 = vector.load %arg8[%c0_1, %c0_2] : memref<1x32xf32, #tpu.memory_space<vmem>>, vector<1x32xf32>
    %c0_3 = arith.constant 0 : index
    %c0_4 = arith.constant 0 : index
    %2 = vector.load %arg9[%c0_3, %c0_4] : memref<1x32xf32, #tpu.memory_space<vmem>>, vector<1x32xf32>
    %cst = arith.constant dense<0.000000e+00> : vector<16xf32>
    %3 = vector.multi_reduction <add>, %0, %cst [1] : vector<16x32xf32> to vector<16xf32>
    %4 = vector.shape_cast %3 : vector<16xf32> to vector<16x1xf32>
    %cst_5 = arith.constant 3.200000e+01 : f32
    %5 = vector.broadcast %cst_5 : f32 to vector<16x1xf32>
    %6 = arith.divf %4, %5 : vector<16x1xf32>
    %7 = vector.broadcast %6 : vector<16x1xf32> to vector<16x32xf32>
    %8 = arith.subf %0, %7 : vector<16x32xf32>
    %9 = arith.mulf %8, %8 : vector<16x32xf32>
    %cst_6 = arith.constant dense<0.000000e+00> : vector<16xf32>
    %10 = vector.multi_reduction <add>, %9, %cst_6 [1] : vector<16x32xf32> to vector<16xf32>
    %11 = vector.shape_cast %10 : vector<16xf32> to vector<16x1xf32>
    %cst_7 = arith.constant 3.200000e+01 : f32
    %12 = vector.broadcast %cst_7 : f32 to vector<16x1xf32>
    %13 = arith.divf %11, %12 : vector<16x1xf32>
    %cst_8 = arith.constant 9.99999974E-6 : f32
    %14 = vector.broadcast %cst_8 : f32 to vector<16x1xf32>
    %15 = arith.addf %13, %14 : vector<16x1xf32>
    %16 = math.rsqrt %15 : vector<16x1xf32>
    %17 = vector.broadcast %16 : vector<16x1xf32> to vector<16x32xf32>
    %18 = arith.mulf %8, %17 : vector<16x32xf32>
    %19 = vector.broadcast %1 : vector<1x32xf32> to vector<16x32xf32>
    %20 = arith.mulf %19, %18 : vector<16x32xf32>
    %21 = vector.broadcast %2 : vector<1x32xf32> to vector<16x32xf32>
    %22 = arith.addf %20, %21 : vector<16x32xf32>
    %23 = vector.shape_cast %22 : vector<16x32xf32> to vector<2x1x8x32xf32>
    %24 = vector.shape_cast %23 : vector<2x1x8x32xf32> to vector<2x1x8x32xf32>
    %25 = vector.broadcast %24 : vector<2x1x8x32xf32> to vector<2x4x8x32xf32>
    %26 = vector.shape_cast %25 : vector<2x4x8x32xf32> to vector<8x8x32xf32>
    %c0_9 = arith.constant 0 : index
    %c0_10 = arith.constant 0 : index
    %c0_11 = arith.constant 0 : index
    %27 = vector.load %arg1[%c0_9, %c0_10, %c0_11] : memref<8x32x24xf32, #tpu.memory_space<vmem>>, vector<8x32x24xf32>
    "tpu.trace_start"() <{level = 10 : i32, message = "gse,gef->gsf"}> : () -> ()
    %cst_12 = arith.constant dense<0.000000e+00> : vector<8x8x24xf32>
    %28 = tpu.matmul %26, %27, %cst_12 {dimension_numbers = #tpu.dot_dimension_numbers<[2], [1], [1], [2], [0, 0, 0, 1, 1, 2], [0], [0]>} : vector<8x8x32xf32>, vector<8x32x24xf32>, vector<8x8x24xf32> -> vector<8x8x24xf32>
    "tpu.trace_stop"() : () -> ()
    %29 = vector.extract_strided_slice %28 {offsets = [0, 0, 0], sizes = [8, 8, 8], strides = [1, 1, 1]} : vector<8x8x24xf32> to vector<8x8x8xf32>
    %30 = vector.extract_strided_slice %28 {offsets = [0, 0, 8], sizes = [8, 8, 8], strides = [1, 1, 1]} : vector<8x8x24xf32> to vector<8x8x8xf32>
    %31 = vector.extract_strided_slice %28 {offsets = [0, 0, 16], sizes = [8, 8, 8], strides = [1, 1, 1]} : vector<8x8x24xf32> to vector<8x8x8xf32>
    %32 = tpu.iota {dimensions = array<i32: 0>} : vector<8x8xi32>
    %33 = tpu.iota {dimensions = array<i32: 1>} : vector<8x8xi32>
    %34 = arith.cmpi sle, %33, %32 : vector<8x8xi32>
    %35 = vector.shape_cast %34 : vector<8x8xi1> to vector<1x8x8xi1>
    "tpu.trace_start"() <{level = 10 : i32, message = "gqd,gkd->gqk"}> : () -> ()
    %cst_13 = arith.constant dense<0.000000e+00> : vector<8x8x8xf32>
    %36 = tpu.matmul %29, %30, %cst_13 {dimension_numbers = #tpu.dot_dimension_numbers<[2], [2], [1], [1], [0, 0, 0, 1, 1, 1], [0], [0]>} : vector<8x8x8xf32>, vector<8x8x8xf32>, vector<8x8x8xf32> -> vector<8x8x8xf32>
    "tpu.trace_stop"() : () -> ()
    %cst_14 = arith.constant 0.353553385 : f32
    %37 = vector.broadcast %cst_14 : f32 to vector<8x8x8xf32>
    %38 = arith.mulf %36, %37 : vector<8x8x8xf32>
    %cst_15 = arith.constant -1.000000e+30 : f32
    %39 = vector.shape_cast %35 : vector<1x8x8xi1> to vector<1x8x8xi1>
    %40 = vector.broadcast %39 : vector<1x8x8xi1> to vector<8x8x8xi1>
    %41 = vector.broadcast %cst_15 : f32 to vector<8x8x8xf32>
    %42 = arith.select %40, %38, %41 : vector<8x8x8xi1>, vector<8x8x8xf32>
    %cst_16 = arith.constant dense<0xFF800000> : vector<8x8xf32>
    %43 = vector.multi_reduction <maximumf>, %42, %cst_16 [2] : vector<8x8x8xf32> to vector<8x8xf32>
    %44 = vector.shape_cast %43 : vector<8x8xf32> to vector<8x8x1xf32>
    %45 = vector.broadcast %44 : vector<8x8x1xf32> to vector<8x8x8xf32>
    %46 = arith.subf %42, %45 : vector<8x8x8xf32>
    %47 = math.exp %46 : vector<8x8x8xf32>
    %cst_17 = arith.constant dense<0.000000e+00> : vector<8x8xf32>
    %48 = vector.multi_reduction <add>, %47, %cst_17 [2] : vector<8x8x8xf32> to vector<8x8xf32>
    %49 = vector.shape_cast %48 : vector<8x8xf32> to vector<8x8x1xf32>
    %50 = tpu.reciprocal %49 {approx = true} : vector<8x8x1xf32> -> vector<8x8x1xf32>
    %51 = vector.broadcast %50 : vector<8x8x1xf32> to vector<8x8x8xf32>
    %52 = arith.mulf %47, %51 : vector<8x8x8xf32>
    "tpu.trace_start"() <{level = 10 : i32, message = "gqk,gkd->gqd"}> : () -> ()
    %cst_18 = arith.constant dense<0.000000e+00> : vector<8x8x8xf32>
    %53 = tpu.matmul %52, %31, %cst_18 {dimension_numbers = #tpu.dot_dimension_numbers<[2], [1], [1], [2], [0, 0, 0, 1, 1, 2], [0], [0]>} : vector<8x8x8xf32>, vector<8x8x8xf32>, vector<8x8x8xf32> -> vector<8x8x8xf32>
    "tpu.trace_stop"() : () -> ()
    %c0_19 = arith.constant 0 : index
    %c0_20 = arith.constant 0 : index
    %c0_21 = arith.constant 0 : index
    %54 = vector.load %arg2[%c0_19, %c0_20, %c0_21] : memref<8x8x32xf32, #tpu.memory_space<vmem>>, vector<8x8x32xf32>
    "tpu.trace_start"() <{level = 10 : i32, message = "gsd,gde->gse"}> : () -> ()
    %cst_22 = arith.constant dense<0.000000e+00> : vector<8x8x32xf32>
    %55 = tpu.matmul %53, %54, %cst_22 {dimension_numbers = #tpu.dot_dimension_numbers<[2], [1], [1], [2], [0, 0, 0, 1, 1, 2], [0], [0]>} : vector<8x8x8xf32>, vector<8x8x32xf32>, vector<8x8x32xf32> -> vector<8x8x32xf32>
    "tpu.trace_stop"() : () -> ()
    %56 = vector.shape_cast %55 : vector<8x8x32xf32> to vector<2x4x8x32xf32>
    %cst_23 = arith.constant dense<0.000000e+00> : vector<2x8x32xf32>
    %57 = vector.multi_reduction <add>, %56, %cst_23 [1] : vector<2x4x8x32xf32> to vector<2x8x32xf32>
    %58 = vector.shape_cast %57 : vector<2x8x32xf32> to vector<16x32xf32>
    %c0_24 = arith.constant 0 : index
    %c0_25 = arith.constant 0 : index
    %59 = vector.load %arg3[%c0_24, %c0_25] : memref<1x32xf32, #tpu.memory_space<vmem>>, vector<1x32xf32>
    %60 = vector.broadcast %59 : vector<1x32xf32> to vector<16x32xf32>
    %61 = arith.addf %58, %60 : vector<16x32xf32>
    %62 = arith.addf %61, %0 : vector<16x32xf32>
    %c0_26 = arith.constant 0 : index
    %c0_27 = arith.constant 0 : index
    %63 = vector.load %arg10[%c0_26, %c0_27] : memref<1x32xf32, #tpu.memory_space<vmem>>, vector<1x32xf32>
    %c0_28 = arith.constant 0 : index
    %c0_29 = arith.constant 0 : index
    %64 = vector.load %arg11[%c0_28, %c0_29] : memref<1x32xf32, #tpu.memory_space<vmem>>, vector<1x32xf32>
    %cst_30 = arith.constant dense<0.000000e+00> : vector<16xf32>
    %65 = vector.multi_reduction <add>, %62, %cst_30 [1] : vector<16x32xf32> to vector<16xf32>
    %66 = vector.shape_cast %65 : vector<16xf32> to vector<16x1xf32>
    %cst_31 = arith.constant 3.200000e+01 : f32
    %67 = vector.broadcast %cst_31 : f32 to vector<16x1xf32>
    %68 = arith.divf %66, %67 : vector<16x1xf32>
    %69 = vector.broadcast %68 : vector<16x1xf32> to vector<16x32xf32>
    %70 = arith.subf %62, %69 : vector<16x32xf32>
    %71 = arith.mulf %70, %70 : vector<16x32xf32>
    %cst_32 = arith.constant dense<0.000000e+00> : vector<16xf32>
    %72 = vector.multi_reduction <add>, %71, %cst_32 [1] : vector<16x32xf32> to vector<16xf32>
    %73 = vector.shape_cast %72 : vector<16xf32> to vector<16x1xf32>
    %cst_33 = arith.constant 3.200000e+01 : f32
    %74 = vector.broadcast %cst_33 : f32 to vector<16x1xf32>
    %75 = arith.divf %73, %74 : vector<16x1xf32>
    %cst_34 = arith.constant 9.99999974E-6 : f32
    %76 = vector.broadcast %cst_34 : f32 to vector<16x1xf32>
    %77 = arith.addf %75, %76 : vector<16x1xf32>
    %78 = math.rsqrt %77 : vector<16x1xf32>
    %79 = vector.broadcast %78 : vector<16x1xf32> to vector<16x32xf32>
    %80 = arith.mulf %70, %79 : vector<16x32xf32>
    %81 = vector.broadcast %63 : vector<1x32xf32> to vector<16x32xf32>
    %82 = arith.mulf %81, %80 : vector<16x32xf32>
    %83 = vector.broadcast %64 : vector<1x32xf32> to vector<16x32xf32>
    %84 = arith.addf %82, %83 : vector<16x32xf32>
    %c0_35 = arith.constant 0 : index
    %c0_36 = arith.constant 0 : index
    %85 = vector.load %arg4[%c0_35, %c0_36] : memref<32x128xf32, #tpu.memory_space<vmem>>, vector<32x128xf32>
    %cst_37 = arith.constant dense<0.000000e+00> : vector<16x128xf32>
    %86 = tpu.matmul %84, %85, %cst_37 {dimension_numbers = #tpu.dot_dimension_numbers<[1], [0], [0], [1], [0, 0, 1, 1], [], []>} : vector<16x32xf32>, vector<32x128xf32>, vector<16x128xf32> -> vector<16x128xf32>
    %c0_38 = arith.constant 0 : index
    %c0_39 = arith.constant 0 : index
    %87 = vector.load %arg5[%c0_38, %c0_39] : memref<1x128xf32, #tpu.memory_space<vmem>>, vector<1x128xf32>
    %88 = vector.broadcast %87 : vector<1x128xf32> to vector<16x128xf32>
    %89 = arith.addf %86, %88 : vector<16x128xf32>
    %cst_40 = arith.constant 5.000000e-01 : f32
    %90 = vector.broadcast %cst_40 : f32 to vector<16x128xf32>
    %91 = arith.mulf %90, %89 : vector<16x128xf32>
    %cst_41 = arith.constant 4.471500e-02 : f32
    %92 = vector.broadcast %cst_41 : f32 to vector<16x128xf32>
    %93 = arith.mulf %92, %89 : vector<16x128xf32>
    %94 = arith.mulf %93, %89 : vector<16x128xf32>
    %95 = arith.mulf %94, %89 : vector<16x128xf32>
    %96 = arith.addf %89, %95 : vector<16x128xf32>
    %cst_42 = arith.constant 0.797884583 : f32
    %97 = vector.broadcast %cst_42 : f32 to vector<16x128xf32>
    %98 = arith.mulf %97, %96 : vector<16x128xf32>
    %99 = math.tanh %98 : vector<16x128xf32>
    %cst_43 = arith.constant 1.000000e+00 : f32
    %100 = vector.broadcast %cst_43 : f32 to vector<16x128xf32>
    %101 = arith.addf %100, %99 : vector<16x128xf32>
    %102 = arith.mulf %91, %101 : vector<16x128xf32>
    %c0_44 = arith.constant 0 : index
    %c0_45 = arith.constant 0 : index
    %103 = vector.load %arg6[%c0_44, %c0_45] : memref<128x32xf32, #tpu.memory_space<vmem>>, vector<128x32xf32>
    %cst_46 = arith.constant dense<0.000000e+00> : vector<16x32xf32>
    %104 = tpu.matmul %102, %103, %cst_46 {dimension_numbers = #tpu.dot_dimension_numbers<[1], [0], [0], [1], [0, 0, 1, 1], [], []>} : vector<16x128xf32>, vector<128x32xf32>, vector<16x32xf32> -> vector<16x32xf32>
    %c0_47 = arith.constant 0 : index
    %c0_48 = arith.constant 0 : index
    %105 = vector.load %arg7[%c0_47, %c0_48] : memref<1x32xf32, #tpu.memory_space<vmem>>, vector<1x32xf32>
    %106 = vector.broadcast %105 : vector<1x32xf32> to vector<16x32xf32>
    %107 = arith.addf %104, %106 : vector<16x32xf32>
    %108 = arith.addf %107, %62 : vector<16x32xf32>
    %c0_49 = arith.constant 0 : index
    %c0_50 = arith.constant 0 : index
    %109 = vector.load %arg12[%c0_49, %c0_50] : memref<16x32xf32, #tpu.memory_space<vmem>>, vector<16x32xf32>
    tpu.vector_store %arg12[%c0_49, %c0_50], %108 {strides = array<i32>} : memref<16x32xf32, #tpu.memory_space<vmem>>, vector<16x32xf32>,
    return
  }
}

</mosaic_0001>

<llo_original>
// kernel: tpu_custom_call.1
$region0: #{tpu_custom_call.1}
  #allocation0 [shape = 'u32[]', space=smem, size = 0x4, offset = 0x4, fixed_abs, tag = 'smem constant byte address 0x4 - core index']
  #allocation1 [shape = 'u32[72,128]{1,0:T(1,128)}', space=vmem, size = 0x9000, scoped, tag = 'internal scratch']
  %s0 = inlined_call_operand.vmem [shape: f32[16,32], index: 0, kind: input, shape index: {}]
  %s1 = inlined_call_operand.vmem [shape: f32[8,32,24], index: 1, kind: input, shape index: {}]
  %s2 = inlined_call_operand.vmem [shape: f32[8,8,32], index: 2, kind: input, shape index: {}]
  %s3 = inlined_call_operand.vmem [shape: f32[1,32], index: 3, kind: input, shape index: {}]
  %s4 = inlined_call_operand.vmem [shape: f32[32,128], index: 4, kind: input, shape index: {}]
  %s5 = inlined_call_operand.vmem [shape: f32[1,128], index: 5, kind: input, shape index: {}]
  %s6 = inlined_call_operand.vmem [shape: f32[128,32], index: 6, kind: input, shape index: {}]
  %s7 = inlined_call_operand.vmem [shape: f32[1,32], index: 7, kind: input, shape index: {}]
  %s8 = inlined_call_operand.vmem [shape: f32[1,32], index: 8, kind: input, shape index: {}]
  %s9 = inlined_call_operand.vmem [shape: f32[1,32], index: 9, kind: input, shape index: {}]
  %s10 = inlined_call_operand.vmem [shape: f32[1,32], index: 10, kind: input, shape index: {}]
  %s11 = inlined_call_operand.vmem [shape: f32[1,32], index: 11, kind: input, shape index: {}]
  %s12 = inlined_call_operand.hbm [shape: f32[16,32], index: 12, kind: output, shape index: {}]
  %s13 = sld [smem:[#allocation0]]
  $region58: #{tpu_custom_call.1} parent=0
    _
  %s15 = ssub.s32 1, %s13
  %s16 = scalar_select 0, %s15, %s13
  $region1: #{tpu_custom_call.1} parent=0
    #allocation2 [shape = 'u8[8192]{0}', space=vmem, size = 0x2000, scoped, tag = 'output window, operand 0, single buffered']
    #allocation3 [shape = 's32[1]{0}', space=sflag, size = 0x4, scoped, tag = 'scoped memory for tpu_custom_call.1']
    %17 = vsyncpa [#allocation3], 0
    // Predicated region
    $region2: #{tpu_custom_call.1} parent=1 // pred_check
      _
    $region3: #{tpu_custom_call.1} parent=1 // pred_check_branch
      %19 = sbr.rel (0) target = $region5
    $region4: #{tpu_custom_call.1} parent=1 // pred_region
      _
    $region5: #{tpu_custom_call.1} parent=1 // pred_fallthru
      _
    // Predicated region
    $region6: #{tpu_custom_call.1} parent=1 // pred_check
      _
    $region7: #{tpu_custom_call.1} parent=1 // pred_check_branch
      %21 = sbr.rel (0) target = $region9
    $region8: #{tpu_custom_call.1} parent=1 // pred_region
      _
    $region9: #{tpu_custom_call.1} parent=1 // pred_fallthru
      _
    // Predicated region
    $region10: #{tpu_custom_call.1} parent=1 // pred_check
      _
    $region11: #{tpu_custom_call.1} parent=1 // pred_check_branch
      %23 = sbr.rel (0) target = $region13
    $region12: #{tpu_custom_call.1} parent=1 // pred_region
      _
    $region13: #{tpu_custom_call.1} parent=1 // pred_fallthru
      _
    // Predicated region
    $region14: #{tpu_custom_call.1} parent=1 // pred_check
      _
    $region15: #{tpu_custom_call.1} parent=1 // pred_check_branch
      %25 = sbr.rel (0) target = $region17
    $region16: #{tpu_custom_call.1} parent=1 // pred_region
      _
    $region17: #{tpu_custom_call.1} parent=1 // pred_fallthru
      _
    // Predicated region
    $region18: #{tpu_custom_call.1} parent=1 // pred_check
      _
    $region19: #{tpu_custom_call.1} parent=1 // pred_check_branch
      %27 = sbr.rel (0) target = $region21
    $region20: #{tpu_custom_call.1} parent=1 // pred_region
      _
    $region21: #{tpu_custom_call.1} parent=1 // pred_fallthru
      _
    // Predicated region
    $region22: #{tpu_custom_call.1} parent=1 // pred_check
      _
    $region23: #{tpu_custom_call.1} parent=1 // pred_check_branch
      %29 = sbr.rel (0) target = $region25
    $region24: #{tpu_custom_call.1} parent=1 // pred_region
      _
    $region25: #{tpu_custom_call.1} parent=1 // pred_fallthru
      _
    // Predicated region
    $region26: #{tpu_custom_call.1} parent=1 // pred_check
      _
    $region27: #{tpu_custom_call.1} parent=1 // pred_check_branch
      %31 = sbr.rel (0) target = $region29
    $region28: #{tpu_custom_call.1} parent=1 // pred_region
      _
    $region29: #{tpu_custom_call.1} parent=1 // pred_fallthru
      _
    // Predicated region
    $region30: #{tpu_custom_call.1} parent=1 // pred_check
      _
    $region31: #{tpu_custom_call.1} parent=1 // pred_check_branch
      %33 = sbr.rel (0) target = $region33
    $region32: #{tpu_custom_call.1} parent=1 // pred_region
      _
    $region33: #{tpu_custom_call.1} parent=1 // pred_fallthru
      _
    // Predicated region
    $region34: #{tpu_custom_call.1} parent=1 // pred_check
      _
    $region35: #{tpu_custom_call.1} parent=1 // pred_check_branch
      %35 = sbr.rel (0) target = $region37
    $region36: #{tpu_custom_call.1} parent=1 // pred_region
      _
    $region37: #{tpu_custom_call.1} parent=1 // pred_fallthru
      _
    // Predicated region
    $region38: #{tpu_custom_call.1} parent=1 // pred_check
      _
    $region39: #{tpu_custom_call.1} parent=1 // pred_check_branch
      %37 = sbr.rel (0) target = $region41
    $region40: #{tpu_custom_call.1} parent=1 // pred_region
      _
    $region41: #{tpu_custom_call.1} parent=1 // pred_fallthru
      _
    // Predicated region
    $region42: #{tpu_custom_call.1} parent=1 // pred_check
      _
    $region43: #{tpu_custom_call.1} parent=1 // pred_check_branch
      %39 = sbr.rel (0) target = $region45
    $region44: #{tpu_custom_call.1} parent=1 // pred_region
      _
    $region45: #{tpu_custom_call.1} parent=1 // pred_fallthru
      _
    // Predicated region
    $region46: #{tpu_custom_call.1} parent=1 // pred_check
      _
    $region47: #{tpu_custom_call.1} parent=1 // pred_check_branch
      %41 = sbr.rel (0) target = $region49
    $region48: #{tpu_custom_call.1} parent=1 // pred_region
      _
    $region49: #{tpu_custom_call.1} parent=1 // pred_fallthru
      _
    %v42 = vld [vmem:[%s0] sm:$0xff]
    %v43 = vld [vmem:[%s0 + $0x8] sm:$0xff]
    %v44 = vld [vmem:[%s8] sm:$0x1]
    %v45 = vld [vmem:[%s9] sm:$0x1]
    %vm46 = vcmask 261120
    %v47 = vsel %vm46, %v42, 0.0
    %48 = vadd.xlane.f32.xlu0 %v47
    %v49 = vpop.xlane.xlu0 %48
    %v50 = vsel %vm46, %v43, 0.0
    %51 = vadd.xlane.f32.xlu0 %v50
    %v52 = vpop.xlane.xlu0 %51
    %v53 = vrcp.pop 32.0
    %v54 = vmul.f32 32.0, %v53
    %v55 = vsub.f32 1.0, %v54
    %v56 = vmul.f32 %v53, %v55
    %v57 = vadd.f32 %v53, %v56
    %vm58 = vweird.f32 %v53
    %v59 = vsel %vm58, %v53, %v57
    %v60 = vmul.f32 %v49, %v59
    %v61 = vmul.f32 %v52, %v59
    %v62 = vsub.f32 %v42, %v60
    %v63 = vsub.f32 %v43, %v61
    %v64 = vmul.f32 %v62, %v62
    %v65 = vmul.f32 %v63, %v63
    %v66 = vsel %vm46, %v64, 0.0
    %67 = vadd.xlane.f32.xlu0 %v66
    %v68 = vpop.xlane.xlu0 %67
    %v69 = vsel %vm46, %v65, 0.0
    %70 = vadd.xlane.f32.xlu0 %v69
    %v71 = vpop.xlane.xlu0 %70
    %v72 = vmul.f32 %v68, %v59
    %v73 = vmul.f32 %v71, %v59
    %v74 = vadd.f32 %v72, 1e-05
    %v75 = vadd.f32 %v73, 1e-05
    %v76 = vrsqrt.pop %v74
    %v77 = vmul.f32 %v76, %v74
    %v78 = vmul.f32 %v77, %v76
    %v79 = vmul.f32 0.5, %v78
    %v80 = vsub.f32 1.5, %v79
    %v81 = vmul.f32 %v76, %v80
    %vm82 = vweird.f32 %v74
    %vm83 = vweird.f32 %v76
    %vm84 = vmor %vm82, %vm83
    %v85 = vsel %vm84, %v76, %v81
    %v86 = vrsqrt.pop %v75
    %v87 = vmul.f32 %v86, %v75
    %v88 = vmul.f32 %v87, %v86
    %v89 = vmul.f32 0.5, %v88
    %v90 = vsub.f32 1.5, %v89
    %v91 = vmul.f32 %v86, %v90
    %vm92 = vweird.f32 %v75
    %vm93 = vweird.f32 %v86
    %vm94 = vmor %vm92, %vm93
    %v95 = vsel %vm94, %v86, %v91
    %v96 = vmul.f32 %v62, %v85
    %v97 = vmul.f32 %v63, %v95
    %v99 = vperm.slane %v44, 0
    %v101 = vmul.f32 %v99, %v96
    %v102 = vmul.f32 %v99, %v97
    %v104 = vperm.slane %v45, 0
    %v106 = vadd.f32 %v101, %v104
    %v107 = vadd.f32 %v102, %v104
    %v108 = vld [vmem:[%s1] sm:$0xff]
    %v109 = vld [vmem:[%s1 + $0x8] sm:$0xff]
    %v110 = vld [vmem:[%s1 + $0x10] sm:$0xff]
    %v111 = vld [vmem:[%s1 + $0x18] sm:$0xff]
    %v112 = vld [vmem:[%s1 + $0x20] sm:$0xff]
    %v113 = vld [vmem:[%s1 + $0x28] sm:$0xff]
    %v114 = vld [vmem:[%s1 + $0x30] sm:$0xff]
    %v115 = vld [vmem:[%s1 + $0x38] sm:$0xff]
    %v116 = vld [vmem:[%s1 + $0x40] sm:$0xff]
    %v117 = vld [vmem:[%s1 + $0x48] sm:$0xff]
    %v118 = vld [vmem:[%s1 + $0x50] sm:$0xff]
    %v119 = vld [vmem:[%s1 + $0x58] sm:$0xff]
    %v120 = vld [vmem:[%s1 + $0x60] sm:$0xff]
    %v121 = vld [vmem:[%s1 + $0x68] sm:$0xff]
    %v122 = vld [vmem:[%s1 + $0x70] sm:$0xff]
    %v123 = vld [vmem:[%s1 + $0x78] sm:$0xff]
    %v124 = vld [vmem:[%s1 + $0x80] sm:$0xff]
    %v125 = vld [vmem:[%s1 + $0x88] sm:$0xff]
    %v126 = vld [vmem:[%s1 + $0x90] sm:$0xff]
    %v127 = vld [vmem:[%s1 + $0x98] sm:$0xff]
    %v128 = vld [vmem:[%s1 + $0xa0] sm:$0xff]
    %v129 = vld [vmem:[%s1 + $0xa8] sm:$0xff]
    %v130 = vld [vmem:[%s1 + $0xb0] sm:$0xff]
    %v131 = vld [vmem:[%s1 + $0xb8] sm:$0xff]
    %v132 = vld [vmem:[%s1 + $0xc0] sm:$0xff]
    %v133 = vld [vmem:[%s1 + $0xc8] sm:$0xff]
    %v134 = vld [vmem:[%s1 + $0xd0] sm:$0xff]
    %v135 = vld [vmem:[%s1 + $0xd8] sm:$0xff]
    %v136 = vld [vmem:[%s1 + $0xe0] sm:$0xff]
    %v137 = vld [vmem:[%s1 + $0xe8] sm:$0xff]
    %v138 = vld [vmem:[%s1 + $0xf0] sm:$0xff]
    %v139 = vld [vmem:[%s1 + $0xf8] sm:$0xff]
    %v141 = vsel %vm46, %v106, 0
    %143 = vmatpush.msra.mxu0 0.0
    %144 = vmatpush.msra.mxu0 0.0
    %145 = vmatpush.msra.mxu0 0.0
    %146 = vmatpush.msra.mxu0 0.0
    %147 = vmatpush.msra.mxu0 0.0
    %148 = vmatpush.msra.mxu0 0.0
    %149 = vmatpush.msra.mxu0 0.0
    %150 = vmatpush.msra.mxu0 0.0
    %151 = vmatpush.msra.mxu0 0.0
    %152 = vmatpush.msra.mxu0 0.0
    %153 = vmatpush.msra.mxu0 0.0
    %154 = vmatpush.msra.mxu0 0.0
    %155 = vmatpush.msra.mxu0 %v111
    %156 = vmatpush.msra.mxu0 %v110
    %157 = vmatpush.msra.mxu0 %v109
    %158 = vmatpush.msra.mxu0 %v108
    %159 = vmatmul.f32.gmra.mxu0 %v141
    %v160 = vpop.f32.mrf.mxu0
    %v161 = vadd.f32 0.0, %v160
    %162 = vdwg.mxu0
    %163 = vmatpush.msra.mxu0 0.0
    %164 = vmatpush.msra.mxu0 0.0
    %165 = vmatpush.msra.mxu0 0.0
    %166 = vmatpush.msra.mxu0 0.0
    %167 = vmatpush.msra.mxu0 0.0
    %168 = vmatpush.msra.mxu0 0.0
    %169 = vmatpush.msra.mxu0 0.0
    %170 = vmatpush.msra.mxu0 0.0
    %171 = vmatpush.msra.mxu0 0.0
    %172 = vmatpush.msra.mxu0 0.0
    %173 = vmatpush.msra.mxu0 0.0
    %174 = vmatpush.msra.mxu0 0.0
    %175 = vmatpush.msra.mxu0 %v115
    %176 = vmatpush.msra.mxu0 %v114
    %177 = vmatpush.msra.mxu0 %v113
    %178 = vmatpush.msra.mxu0 %v112
    %179 = vmatmul.f32.gmra.mxu0 %v141
    %v180 = vpop.f32.mrf.mxu0
    %v181 = vadd.f32 0.0, %v180
    %182 = vdwg.mxu0
    %183 = vmatpush.msra.mxu0 0.0
    %184 = vmatpush.msra.mxu0 0.0
    %185 = vmatpush.msra.mxu0 0.0
    %186 = vmatpush.msra.mxu0 0.0
    %187 = vmatpush.msra.mxu0 0.0
    %188 = vmatpush.msra.mxu0 0.0
    %189 = vmatpush.msra.mxu0 0.0
    %190 = vmatpush.msra.mxu0 0.0
    %191 = vmatpush.msra.mxu0 0.0
    %192 = vmatpush.msra.mxu0 0.0
    %193 = vmatpush.msra.mxu0 0.0
    %194 = vmatpush.msra.mxu0 0.0
    %195 = vmatpush.msra.mxu0 %v119
    %196 = vmatpush.msra.mxu0 %v118
    %197 = vmatpush.msra.mxu0 %v117
    %198 = vmatpush.msra.mxu0 %v116
    %199 = vmatmul.f32.gmra.mxu0 %v141
    %v200 = vpop.f32.mrf.mxu0
    %v201 = vadd.f32 0.0, %v200
    %202 = vdwg.mxu0
    %203 = vmatpush.msra.mxu0 0.0
    %204 = vmatpush.msra.mxu0 0.0
    %205 = vmatpush.msra.mxu0 0.0
    %206 = vmatpush.msra.mxu0 0.0
    %207 = vmatpush.msra.mxu0 0.0
    %208 = vmatpush.msra.mxu0 0.0
    %209 = vmatpush.msra.mxu0 0.0
    %210 = vmatpush.msra.mxu0 0.0
    %211 = vmatpush.msra.mxu0 0.0
    %212 = vmatpush.msra.mxu0 0.0
    %213 = vmatpush.msra.mxu0 0.0
    %214 = vmatpush.msra.mxu0 0.0
    %215 = vmatpush.msra.mxu0 %v123
    %216 = vmatpush.msra.mxu0 %v122
    %217 = vmatpush.msra.mxu0 %v121
    %218 = vmatpush.msra.mxu0 %v120
    %219 = vmatmul.f32.gmra.mxu0 %v141
    %v220 = vpop.f32.mrf.mxu0
    %v221 = vadd.f32 0.0, %v220
    %222 = vdwg.mxu0
    %v224 = vsel %vm46, %v107, 0
    %226 = vmatpush.msra.mxu0 0.0
    %227 = vmatpush.msra.mxu0 0.0
    %228 = vmatpush.msra.mxu0 0.0
    %229 = vmatpush.msra.mxu0 0.0
    %230 = vmatpush.msra.mxu0 0.0
    %231 = vmatpush.msra.mxu0 0.0
    %232 = vmatpush.msra.mxu0 0.0
    %233 = vmatpush.msra.mxu0 0.0
    %234 = vmatpush.msra.mxu0 0.0
    %235 = vmatpush.msra.mxu0 0.0
    %236 = vmatpush.msra.mxu0 0.0
    %237 = vmatpush.msra.mxu0 0.0
    %238 = vmatpush.msra.mxu0 %v127
    %239 = vmatpush.msra.mxu0 %v126
    %240 = vmatpush.msra.mxu0 %v125
    %241 = vmatpush.msra.mxu0 %v124
    %242 = vmatmul.f32.gmra.mxu0 %v224
    %v243 = vpop.f32.mrf.mxu0
    %v244 = vadd.f32 0.0, %v243
    %245 = vdwg.mxu0
    %246 = vmatpush.msra.mxu0 0.0
    %247 = vmatpush.msra.mxu0 0.0
    %248 = vmatpush.msra.mxu0 0.0
    %249 = vmatpush.msra.mxu0 0.0
    %250 = vmatpush.msra.mxu0 0.0
    %251 = vmatpush.msra.mxu0 0.0
    %252 = vmatpush.msra.mxu0 0.0
    %253 = vmatpush.msra.mxu0 0.0
    %254 = vmatpush.msra.mxu0 0.0
    %255 = vmatpush.msra.mxu0 0.0
    %256 = vmatpush.msra.mxu0 0.0
    %257 = vmatpush.msra.mxu0 0.0
    %258 = vmatpush.msra.mxu0 %v131
    %259 = vmatpush.msra.mxu0 %v130
    %260 = vmatpush.msra.mxu0 %v129
    %261 = vmatpush.msra.mxu0 %v128
    %262 = vmatmul.f32.gmra.mxu0 %v224
    %v263 = vpop.f32.mrf.mxu0
    %v264 = vadd.f32 0.0, %v263
    %265 = vdwg.mxu0
    %266 = vmatpush.msra.mxu0 0.0
    %267 = vmatpush.msra.mxu0 0.0
    %268 = vmatpush.msra.mxu0 0.0
    %269 = vmatpush.msra.mxu0 0.0
    %270 = vmatpush.msra.mxu0 0.0
    %271 = vmatpush.msra.mxu0 0.0
    %272 = vmatpush.msra.mxu0 0.0
    %273 = vmatpush.msra.mxu0 0.0
    %274 = vmatpush.msra.mxu0 0.0
    %275 = vmatpush.msra.mxu0 0.0
    %276 = vmatpush.msra.mxu0 0.0
    %277 = vmatpush.msra.mxu0 0.0
    %278 = vmatpush.msra.mxu0 %v135
    %279 = vmatpush.msra.mxu0 %v134
    %280 = vmatpush.msra.mxu0 %v133
    %281 = vmatpush.msra.mxu0 %v132
    %282 = vmatmul.f32.gmra.mxu0 %v224
    %v283 = vpop.f32.mrf.mxu0
    %v284 = vadd.f32 0.0, %v283
    %285 = vdwg.mxu0
    %286 = vmatpush.msra.mxu0 0.0
    %287 = vmatpush.msra.mxu0 0.0
    %288 = vmatpush.msra.mxu0 0.0
    %289 = vmatpush.msra.mxu0 0.0
    %290 = vmatpush.msra.mxu0 0.0
    %291 = vmatpush.msra.mxu0 0.0
    %292 = vmatpush.msra.mxu0 0.0
    %293 = vmatpush.msra.mxu0 0.0
    %294 = vmatpush.msra.mxu0 0.0
    %295 = vmatpush.msra.mxu0 0.0
    %296 = vmatpush.msra.mxu0 0.0
    %297 = vmatpush.msra.mxu0 0.0
    %298 = vmatpush.msra.mxu0 %v139
    %299 = vmatpush.msra.mxu0 %v138
    %300 = vmatpush.msra.mxu0 %v137
    %301 = vmatpush.msra.mxu0 %v136
    %302 = vmatmul.f32.gmra.mxu0 %v224
    %v303 = vpop.f32.mrf.mxu0
    %v304 = vadd.f32 0.0, %v303
    %305 = vdwg.mxu0
    %v306 = vlaneseq
    %v307 = vshrl.u32 %v306, 7
    %v308 = vlaneseq
    %v309 = vand.u32 %v308, 127
    %vm310 = vcmp.le.s32.totalorder %v309, %v307
    %312 = vrot.lane.b32.xlu0 %v161, 120
    %v313 = vpop.permute.xlu0 %312
    %vm314 = vcmask 64512
    %v315 = vsel %vm314, %v161, 0
    %v317 = vsel %vm314, %v313, 0
    %319 = vmatpush.xpose.msra.mxu0 0.0
    %320 = vmatpush.xpose.msra.mxu0 0.0
    %321 = vmatpush.xpose.msra.mxu0 0.0
    %322 = vmatpush.xpose.msra.mxu0 0.0
    %323 = vmatpush.xpose.msra.mxu0 0.0
    %324 = vmatpush.xpose.msra.mxu0 0.0
    %325 = vmatpush.xpose.msra.mxu0 0.0
    %326 = vmatpush.xpose.msra.mxu0 0.0
    %327 = vmatpush.xpose.msra.mxu0 0.0
    %328 = vmatpush.xpose.msra.mxu0 0.0
    %329 = vmatpush.xpose.msra.mxu0 0.0
    %330 = vmatpush.xpose.msra.mxu0 0.0
    %331 = vmatpush.xpose.msra.mxu0 0.0
    %332 = vmatpush.xpose.msra.mxu0 0.0
    %333 = vmatpush.xpose.msra.mxu0 0.0
    %334 = vmatpush.xpose.msra.mxu0 %v317
    %335 = vmatmul.f32.gmra.mxu0 %v315
    %v336 = vpop.f32.mrf.mxu0
    %v337 = vadd.f32 0.0, %v336
    %338 = vdwg.mxu0
    %340 = vrot.lane.b32.xlu0 %v181, 120
    %v341 = vpop.permute.xlu0 %340
    %v342 = vsel %vm314, %v181, 0
    %v344 = vsel %vm314, %v341, 0
    %346 = vmatpush.xpose.msra.mxu0 0.0
    %347 = vmatpush.xpose.msra.mxu0 0.0
    %348 = vmatpush.xpose.msra.mxu0 0.0
    %349 = vmatpush.xpose.msra.mxu0 0.0
    %350 = vmatpush.xpose.msra.mxu0 0.0
    %351 = vmatpush.xpose.msra.mxu0 0.0
    %352 = vmatpush.xpose.msra.mxu0 0.0
    %353 = vmatpush.xpose.msra.mxu0 0.0
    %354 = vmatpush.xpose.msra.mxu0 0.0
    %355 = vmatpush.xpose.msra.mxu0 0.0
    %356 = vmatpush.xpose.msra.mxu0 0.0
    %357 = vmatpush.xpose.msra.mxu0 0.0
    %358 = vmatpush.xpose.msra.mxu0 0.0
    %359 = vmatpush.xpose.msra.mxu0 0.0
    %360 = vmatpush.xpose.msra.mxu0 0.0
    %361 = vmatpush.xpose.msra.mxu0 %v344
    %362 = vmatmul.f32.gmra.mxu0 %v342
    %v363 = vpop.f32.mrf.mxu0
    %v364 = vadd.f32 0.0, %v363
    %365 = vdwg.mxu0
    %367 = vrot.lane.b32.xlu0 %v201, 120
    %v368 = vpop.permute.xlu0 %367
    %v369 = vsel %vm314, %v201, 0
    %v371 = vsel %vm314, %v368, 0
    %373 = vmatpush.xpose.msra.mxu0 0.0
    %374 = vmatpush.xpose.msra.mxu0 0.0
    %375 = vmatpush.xpose.msra.mxu0 0.0
    %376 = vmatpush.xpose.msra.mxu0 0.0
    %377 = vmatpush.xpose.msra.mxu0 0.0
    %378 = vmatpush.xpose.msra.mxu0 0.0
    %379 = vmatpush.xpose.msra.mxu0 0.0
    %380 = vmatpush.xpose.msra.mxu0 0.0
    %381 = vmatpush.xpose.msra.mxu0 0.0
    %382 = vmatpush.xpose.msra.mxu0 0.0
    %383 = vmatpush.xpose.msra.mxu0 0.0
    %384 = vmatpush.xpose.msra.mxu0 0.0
    %385 = vmatpush.xpose.msra.mxu0 0.0
    %386 = vmatpush.xpose.msra.mxu0 0.0
    %387 = vmatpush.xpose.msra.mxu0 0.0
    %388 = vmatpush.xpose.msra.mxu0 %v371
    %389 = vmatmul.f32.gmra.mxu0 %v369
    %v390 = vpop.f32.mrf.mxu0
    %v391 = vadd.f32 0.0, %v390
    %392 = vdwg.mxu0
    %394 = vrot.lane.b32.xlu0 %v221, 120
    %v395 = vpop.permute.xlu0 %394
    %v396 = vsel %vm314, %v221, 0
    %v398 = vsel %vm314, %v395, 0
    %400 = vmatpush.xpose.msra.mxu0 0.0
    %401 = vmatpush.xpose.msra.mxu0 0.0
    %402 = vmatpush.xpose.msra.mxu0 0.0
    %403 = vmatpush.xpose.msra.mxu0 0.0
    %404 = vmatpush.xpose.msra.mxu0 0.0
    %405 = vmatpush.xpose.msra.mxu0 0.0
    %406 = vmatpush.xpose.msra.mxu0 0.0
    %407 = vmatpush.xpose.msra.mxu0 0.0
    %408 = vmatpush.xpose.msra.mxu0 0.0
    %409 = vmatpush.xpose.msra.mxu0 0.0
    %410 = vmatpush.xpose.msra.mxu0 0.0
    %411 = vmatpush.xpose.msra.mxu0 0.0
    %412 = vmatpush.xpose.msra.mxu0 0.0
    %413 = vmatpush.xpose.msra.mxu0 0.0
    %414 = vmatpush.xpose.msra.mxu0 0.0
    %415 = vmatpush.xpose.msra.mxu0 %v398
    %416 = vmatmul.f32.gmra.mxu0 %v396
    %v417 = vpop.f32.mrf.mxu0
    %v418 = vadd.f32 0.0, %v417
    %419 = vdwg.mxu0
    %421 = vrot.lane.b32.xlu0 %v244, 120
    %v422 = vpop.permute.xlu0 %421
    %v423 = vsel %vm314, %v244, 0
    %v425 = vsel %vm314, %v422, 0
    %427 = vmatpush.xpose.msra.mxu0 0.0
    %428 = vmatpush.xpose.msra.mxu0 0.0
    %429 = vmatpush.xpose.msra.mxu0 0.0
    %430 = vmatpush.xpose.msra.mxu0 0.0
    %431 = vmatpush.xpose.msra.mxu0 0.0
    %432 = vmatpush.xpose.msra.mxu0 0.0
    %433 = vmatpush.xpose.msra.mxu0 0.0
    %434 = vmatpush.xpose.msra.mxu0 0.0
    %435 = vmatpush.xpose.msra.mxu0 0.0
    %436 = vmatpush.xpose.msra.mxu0 0.0
    %437 = vmatpush.xpose.msra.mxu0 0.0
    %438 = vmatpush.xpose.msra.mxu0 0.0
    %439 = vmatpush.xpose.msra.mxu0 0.0
    %440 = vmatpush.xpose.msra.mxu0 0.0
    %441 = vmatpush.xpose.msra.mxu0 0.0
    %442 = vmatpush.xpose.msra.mxu0 %v425
    %443 = vmatmul.f32.gmra.mxu0 %v423
    %v444 = vpop.f32.mrf.mxu0
    %v445 = vadd.f32 0.0, %v444
    %446 = vdwg.mxu0
    %448 = vrot.lane.b32.xlu0 %v264, 120
    %v449 = vpop.permute.xlu0 %448
    %v450 = vsel %vm314, %v264, 0
    %v452 = vsel %vm314, %v449, 0
    %454 = vmatpush.xpose.msra.mxu0 0.0
    %455 = vmatpush.xpose.msra.mxu0 0.0
    %456 = vmatpush.xpose.msra.mxu0 0.0
    %457 = vmatpush.xpose.msra.mxu0 0.0
    %458 = vmatpush.xpose.msra.mxu0 0.0
    %459 = vmatpush.xpose.msra.mxu0 0.0
    %460 = vmatpush.xpose.msra.mxu0 0.0
    %461 = vmatpush.xpose.msra.mxu0 0.0
    %462 = vmatpush.xpose.msra.mxu0 0.0
    %463 = vmatpush.xpose.msra.mxu0 0.0
    %464 = vmatpush.xpose.msra.mxu0 0.0
    %465 = vmatpush.xpose.msra.mxu0 0.0
    %466 = vmatpush.xpose.msra.mxu0 0.0
    %467 = vmatpush.xpose.msra.mxu0 0.0
    %468 = vmatpush.xpose.msra.mxu0 0.0
    %469 = vmatpush.xpose.msra.mxu0 %v452
    %470 = vmatmul.f32.gmra.mxu0 %v450
    %v471 = vpop.f32.mrf.mxu0
    %v472 = vadd.f32 0.0, %v471
    %473 = vdwg.mxu0
    %475 = vrot.lane.b32.xlu0 %v284, 120
    %v476 = vpop.permute.xlu0 %475
    %v477 = vsel %vm314, %v284, 0
    %v479 = vsel %vm314, %v476, 0
    %481 = vmatpush.xpose.msra.mxu0 0.0
    %482 = vmatpush.xpose.msra.mxu0 0.0
    %483 = vmatpush.xpose.msra.mxu0 0.0
    %484 = vmatpush.xpose.msra.mxu0 0.0
    %485 = vmatpush.xpose.msra.mxu0 0.0
    %486 = vmatpush.xpose.msra.mxu0 0.0
    %487 = vmatpush.xpose.msra.mxu0 0.0
    %488 = vmatpush.xpose.msra.mxu0 0.0
    %489 = vmatpush.xpose.msra.mxu0 0.0
    %490 = vmatpush.xpose.msra.mxu0 0.0
    %491 = vmatpush.xpose.msra.mxu0 0.0
    %492 = vmatpush.xpose.msra.mxu0 0.0
    %493 = vmatpush.xpose.msra.mxu0 0.0
    %494 = vmatpush.xpose.msra.mxu0 0.0
    %495 = vmatpush.xpose.msra.mxu0 0.0
    %496 = vmatpush.xpose.msra.mxu0 %v479
    %497 = vmatmul.f32.gmra.mxu0 %v477
    %v498 = vpop.f32.mrf.mxu0
    %v499 = vadd.f32 0.0, %v498
    %500 = vdwg.mxu0
    %502 = vrot.lane.b32.xlu0 %v304, 120
    %v503 = vpop.permute.xlu0 %502
    %v504 = vsel %vm314, %v304, 0
    %v506 = vsel %vm314, %v503, 0
    %508 = vmatpush.xpose.msra.mxu0 0.0
    %509 = vmatpush.xpose.msra.mxu0 0.0
    %510 = vmatpush.xpose.msra.mxu0 0.0
    %511 = vmatpush.xpose.msra.mxu0 0.0
    %512 = vmatpush.xpose.msra.mxu0 0.0
    %513 = vmatpush.xpose.msra.mxu0 0.0
    %514 = vmatpush.xpose.msra.mxu0 0.0
    %515 = vmatpush.xpose.msra.mxu0 0.0
    %516 = vmatpush.xpose.msra.mxu0 0.0
    %517 = vmatpush.xpose.msra.mxu0 0.0
    %518 = vmatpush.xpose.msra.mxu0 0.0
    %519 = vmatpush.xpose.msra.mxu0 0.0
    %520 = vmatpush.xpose.msra.mxu0 0.0
    %521 = vmatpush.xpose.msra.mxu0 0.0
    %522 = vmatpush.xpose.msra.mxu0 0.0
    %523 = vmatpush.xpose.msra.mxu0 %v506
    %524 = vmatmul.f32.gmra.mxu0 %v504
    %v525 = vpop.f32.mrf.mxu0
    %v526 = vadd.f32 0.0, %v525
    %527 = vdwg.mxu0
    %v528 = vmul.f32 %v337, 0.35355338
    %v529 = vmul.f32 %v364, 0.35355338
    %v530 = vmul.f32 %v391, 0.35355338
    %v531 = vmul.f32 %v418, 0.35355338
    %v532 = vmul.f32 %v445, 0.35355338
    %v533 = vmul.f32 %v472, 0.35355338
    %v534 = vmul.f32 %v499, 0.35355338
    %v535 = vmul.f32 %v526, 0.35355338
    %v536 = vsel %vm310, 1, 0
    %vm537 = vcmp.eq.s32.totalorder %v536, 1
    %v538 = vsel %vm537, %v528, -1e+30
    %v539 = vsel %vm537, %v529, -1e+30
    %v540 = vsel %vm537, %v530, -1e+30
    %v541 = vsel %vm537, %v531, -1e+30
    %v542 = vsel %vm537, %v532, -1e+30
    %v543 = vsel %vm537, %v533, -1e+30
    %v544 = vsel %vm537, %v534, -1e+30
    %v545 = vsel %vm537, %v535, -1e+30
    %v546 = vsel %vm314, %v538, -inf
    %547 = vmax.xlane.f32.xlu0 %v546
    %v548 = vpop.xlane.xlu0 %547
    %v549 = vsel %vm314, %v539, -inf
    %550 = vmax.xlane.f32.xlu0 %v549
    %v551 = vpop.xlane.xlu0 %550
    %v552 = vsel %vm314, %v540, -inf
    %553 = vmax.xlane.f32.xlu0 %v552
    %v554 = vpop.xlane.xlu0 %553
    %v555 = vsel %vm314, %v541, -inf
    %556 = vmax.xlane.f32.xlu0 %v555
    %v557 = vpop.xlane.xlu0 %556
    %v558 = vsel %vm314, %v542, -inf
    %559 = vmax.xlane.f32.xlu0 %v558
    %v560 = vpop.xlane.xlu0 %559
    %v561 = vsel %vm314, %v543, -inf
    %562 = vmax.xlane.f32.xlu0 %v561
    %v563 = vpop.xlane.xlu0 %562
    %v564 = vsel %vm314, %v544, -inf
    %565 = vmax.xlane.f32.xlu0 %v564
    %v566 = vpop.xlane.xlu0 %565
    %v567 = vsel %vm314, %v545, -inf
    %568 = vmax.xlane.f32.xlu0 %v567
    %v569 = vpop.xlane.xlu0 %568
    %v570 = vsub.f32 %v538, %v548
    %v571 = vsub.f32 %v539, %v551
    %v572 = vsub.f32 %v540, %v554
    %v573 = vsub.f32 %v541, %v557
    %v574 = vsub.f32 %v542, %v560
    %v575 = vsub.f32 %v543, %v563
    %v576 = vsub.f32 %v544, %v566
    %v577 = vsub.f32 %v545, %v569
    %v578 = vmul.f32 %v570, 1.442695
    %v579 = vpow.pop %v578
    %v580 = vmul.f32 %v571, 1.442695
    %v581 = vpow.pop %v580
    %v582 = vmul.f32 %v572, 1.442695
    %v583 = vpow.pop %v582
    %v584 = vmul.f32 %v573, 1.442695
    %v585 = vpow.pop %v584
    %v586 = vmul.f32 %v574, 1.442695
    %v587 = vpow.pop %v586
    %v588 = vmul.f32 %v575, 1.442695
    %v589 = vpow.pop %v588
    %v590 = vmul.f32 %v576, 1.442695
    %v591 = vpow.pop %v590
    %v592 = vmul.f32 %v577, 1.442695
    %v593 = vpow.pop %v592
    %v594 = vsel %vm314, %v579, 0.0
    %595 = vadd.xlane.f32.xlu0 %v594
    %v596 = vpop.xlane.xlu0 %595
    %v597 = vsel %vm314, %v581, 0.0
    %598 = vadd.xlane.f32.xlu0 %v597
    %v599 = vpop.xlane.xlu0 %598
    %v600 = vsel %vm314, %v583, 0.0
    %601 = vadd.xlane.f32.xlu0 %v600
    %v602 = vpop.xlane.xlu0 %601
    %v603 = vsel %vm314, %v585, 0.0
    %604 = vadd.xlane.f32.xlu0 %v603
    %v605 = vpop.xlane.xlu0 %604
    %v606 = vsel %vm314, %v587, 0.0
    %607 = vadd.xlane.f32.xlu0 %v606
    %v608 = vpop.xlane.xlu0 %607
    %v609 = vsel %vm314, %v589, 0.0
    %610 = vadd.xlane.f32.xlu0 %v609
    %v611 = vpop.xlane.xlu0 %610
    %v612 = vsel %vm314, %v591, 0.0
    %613 = vadd.xlane.f32.xlu0 %v612
    %v614 = vpop.xlane.xlu0 %613
    %v615 = vsel %vm314, %v593, 0.0
    %616 = vadd.xlane.f32.xlu0 %v615
    %v617 = vpop.xlane.xlu0 %616
    %v618 = vrcp.pop %v596
    %v619 = vrcp.pop %v599
    %v620 = vrcp.pop %v602
    %v621 = vrcp.pop %v605
    %v622 = vrcp.pop %v608
    %v623 = vrcp.pop %v611
    %v624 = vrcp.pop %v614
    %v625 = vrcp.pop %v617
    %v626 = vmul.f32 %v579, %v618
    %v627 = vmul.f32 %v581, %v619
    %v628 = vmul.f32 %v583, %v620
    %v629 = vmul.f32 %v585, %v621
    %v630 = vmul.f32 %v587, %v622
    %v631 = vmul.f32 %v589, %v623
    %v632 = vmul.f32 %v591, %v624
    %v633 = vmul.f32 %v593, %v625
    %634 = vrot.lane.b32.xlu0 %v161, 112
    %v635 = vpop.permute.xlu0 %634
    %v638 = vsel %vm314, %v626, 0
    %640 = vmatpush.msra.mxu0 0.0
    %641 = vmatpush.msra.mxu0 0.0
    %642 = vmatpush.msra.mxu0 0.0
    %643 = vmatpush.msra.mxu0 0.0
    %644 = vmatpush.msra.mxu0 0.0
    %645 = vmatpush.msra.mxu0 0.0
    %646 = vmatpush.msra.mxu0 0.0
    %647 = vmatpush.msra.mxu0 0.0
    %648 = vmatpush.msra.mxu0 0.0
    %649 = vmatpush.msra.mxu0 0.0
    %650 = vmatpush.msra.mxu0 0.0
    %651 = vmatpush.msra.mxu0 0.0
    %652 = vmatpush.msra.mxu0 0.0
    %653 = vmatpush.msra.mxu0 0.0
    %654 = vmatpush.msra.mxu0 0.0
    %655 = vmatpush.msra.mxu0 %v635
    %656 = vmatmul.f32.gmra.mxu0 %v638
    %v657 = vpop.f32.mrf.mxu0
    %v658 = vadd.f32 0.0, %v657
    %659 = vdwg.mxu0
    %660 = vrot.lane.b32.xlu0 %v181, 112
    %v661 = vpop.permute.xlu0 %660
    %v664 = vsel %vm314, %v627, 0
    %666 = vmatpush.msra.mxu0 0.0
    %667 = vmatpush.msra.mxu0 0.0
    %668 = vmatpush.msra.mxu0 0.0
    %669 = vmatpush.msra.mxu0 0.0
    %670 = vmatpush.msra.mxu0 0.0
    %671 = vmatpush.msra.mxu0 0.0
    %672 = vmatpush.msra.mxu0 0.0
    %673 = vmatpush.msra.mxu0 0.0
    %674 = vmatpush.msra.mxu0 0.0
    %675 = vmatpush.msra.mxu0 0.0
    %676 = vmatpush.msra.mxu0 0.0
    %677 = vmatpush.msra.mxu0 0.0
    %678 = vmatpush.msra.mxu0 0.0
    %679 = vmatpush.msra.mxu0 0.0
    %680 = vmatpush.msra.mxu0 0.0
    %681 = vmatpush.msra.mxu0 %v661
    %682 = vmatmul.f32.gmra.mxu0 %v664
    %v683 = vpop.f32.mrf.mxu0
    %v684 = vadd.f32 0.0, %v683
    %685 = vdwg.mxu0
    %686 = vrot.lane.b32.xlu0 %v201, 112
    %v687 = vpop.permute.xlu0 %686
    %v690 = vsel %vm314, %v628, 0
    %692 = vmatpush.msra.mxu0 0.0
    %693 = vmatpush.msra.mxu0 0.0
    %694 = vmatpush.msra.mxu0 0.0
    %695 = vmatpush.msra.mxu0 0.0
    %696 = vmatpush.msra.mxu0 0.0
    %697 = vmatpush.msra.mxu0 0.0
    %698 = vmatpush.msra.mxu0 0.0
    %699 = vmatpush.msra.mxu0 0.0
    %700 = vmatpush.msra.mxu0 0.0
    %701 = vmatpush.msra.mxu0 0.0
    %702 = vmatpush.msra.mxu0 0.0
    %703 = vmatpush.msra.mxu0 0.0
    %704 = vmatpush.msra.mxu0 0.0
    %705 = vmatpush.msra.mxu0 0.0
    %706 = vmatpush.msra.mxu0 0.0
    %707 = vmatpush.msra.mxu0 %v687
    %708 = vmatmul.f32.gmra.mxu0 %v690
    %v709 = vpop.f32.mrf.mxu0
    %v710 = vadd.f32 0.0, %v709
    %711 = vdwg.mxu0
    %712 = vrot.lane.b32.xlu0 %v221, 112
    %v713 = vpop.permute.xlu0 %712
    %v716 = vsel %vm314, %v629, 0
    %718 = vmatpush.msra.mxu0 0.0
    %719 = vmatpush.msra.mxu0 0.0
    %720 = vmatpush.msra.mxu0 0.0
    %721 = vmatpush.msra.mxu0 0.0
    %722 = vmatpush.msra.mxu0 0.0
    %723 = vmatpush.msra.mxu0 0.0
    %724 = vmatpush.msra.mxu0 0.0
    %725 = vmatpush.msra.mxu0 0.0
    %726 = vmatpush.msra.mxu0 0.0
    %727 = vmatpush.msra.mxu0 0.0
    %728 = vmatpush.msra.mxu0 0.0
    %729 = vmatpush.msra.mxu0 0.0
    %730 = vmatpush.msra.mxu0 0.0
    %731 = vmatpush.msra.mxu0 0.0
    %732 = vmatpush.msra.mxu0 0.0
    %733 = vmatpush.msra.mxu0 %v713
    %734 = vmatmul.f32.gmra.mxu0 %v716
    %v735 = vpop.f32.mrf.mxu0
    %v736 = vadd.f32 0.0, %v735
    %737 = vdwg.mxu0
    %738 = vrot.lane.b32.xlu0 %v244, 112
    %v739 = vpop.permute.xlu0 %738
    %v742 = vsel %vm314, %v630, 0
    %744 = vmatpush.msra.mxu0 0.0
    %745 = vmatpush.msra.mxu0 0.0
    %746 = vmatpush.msra.mxu0 0.0
    %747 = vmatpush.msra.mxu0 0.0
    %748 = vmatpush.msra.mxu0 0.0
    %749 = vmatpush.msra.mxu0 0.0
    %750 = vmatpush.msra.mxu0 0.0
    %751 = vmatpush.msra.mxu0 0.0
    %752 = vmatpush.msra.mxu0 0.0
    %753 = vmatpush.msra.mxu0 0.0
    %754 = vmatpush.msra.mxu0 0.0
    %755 = vmatpush.msra.mxu0 0.0
    %756 = vmatpush.msra.mxu0 0.0
    %757 = vmatpush.msra.mxu0 0.0
    %758 = vmatpush.msra.mxu0 0.0
    %759 = vmatpush.msra.mxu0 %v739
    %760 = vmatmul.f32.gmra.mxu0 %v742
    %v761 = vpop.f32.mrf.mxu0
    %v762 = vadd.f32 0.0, %v761
    %763 = vdwg.mxu0
    %764 = vrot.lane.b32.xlu0 %v264, 112
    %v765 = vpop.permute.xlu0 %764
    %v768 = vsel %vm314, %v631, 0
    %770 = vmatpush.msra.mxu0 0.0
    %771 = vmatpush.msra.mxu0 0.0
    %772 = vmatpush.msra.mxu0 0.0
    %773 = vmatpush.msra.mxu0 0.0
    %774 = vmatpush.msra.mxu0 0.0
    %775 = vmatpush.msra.mxu0 0.0
    %776 = vmatpush.msra.mxu0 0.0
    %777 = vmatpush.msra.mxu0 0.0
    %778 = vmatpush.msra.mxu0 0.0
    %779 = vmatpush.msra.mxu0 0.0
    %780 = vmatpush.msra.mxu0 0.0
    %781 = vmatpush.msra.mxu0 0.0
    %782 = vmatpush.msra.mxu0 0.0
    %783 = vmatpush.msra.mxu0 0.0
    %784 = vmatpush.msra.mxu0 0.0
    %785 = vmatpush.msra.mxu0 %v765
    %786 = vmatmul.f32.gmra.mxu0 %v768
    %v787 = vpop.f32.mrf.mxu0
    %v788 = vadd.f32 0.0, %v787
    %789 = vdwg.mxu0
    %790 = vrot.lane.b32.xlu0 %v284, 112
    %v791 = vpop.permute.xlu0 %790
    %v794 = vsel %vm314, %v632, 0
    %796 = vmatpush.msra.mxu0 0.0
    %797 = vmatpush.msra.mxu0 0.0
    %798 = vmatpush.msra.mxu0 0.0
    %799 = vmatpush.msra.mxu0 0.0
    %800 = vmatpush.msra.mxu0 0.0
    %801 = vmatpush.msra.mxu0 0.0
    %802 = vmatpush.msra.mxu0 0.0
    %803 = vmatpush.msra.mxu0 0.0
    %804 = vmatpush.msra.mxu0 0.0
    %805 = vmatpush.msra.mxu0 0.0
    %806 = vmatpush.msra.mxu0 0.0
    %807 = vmatpush.msra.mxu0 0.0
    %808 = vmatpush.msra.mxu0 0.0
    %809 = vmatpush.msra.mxu0 0.0
    %810 = vmatpush.msra.mxu0 0.0
    %811 = vmatpush.msra.mxu0 %v791
    %812 = vmatmul.f32.gmra.mxu0 %v794
    %v813 = vpop.f32.mrf.mxu0
    %v814 = vadd.f32 0.0, %v813
    %815 = vdwg.mxu0
    %816 = vrot.lane.b32.xlu0 %v304, 112
    %v817 = vpop.permute.xlu0 %816
    %v820 = vsel %vm314, %v633, 0
    %822 = vmatpush.msra.mxu0 0.0
    %823 = vmatpush.msra.mxu0 0.0
    %824 = vmatpush.msra.mxu0 0.0
    %825 = vmatpush.msra.mxu0 0.0
    %826 = vmatpush.msra.mxu0 0.0
    %827 = vmatpush.msra.mxu0 0.0
    %828 = vmatpush.msra.mxu0 0.0
    %829 = vmatpush.msra.mxu0 0.0
    %830 = vmatpush.msra.mxu0 0.0
    %831 = vmatpush.msra.mxu0 0.0
    %832 = vmatpush.msra.mxu0 0.0
    %833 = vmatpush.msra.mxu0 0.0
    %834 = vmatpush.msra.mxu0 0.0
    %835 = vmatpush.msra.mxu0 0.0
    %836 = vmatpush.msra.mxu0 0.0
    %837 = vmatpush.msra.mxu0 %v817
    %838 = vmatmul.f32.gmra.mxu0 %v820
    %v839 = vpop.f32.mrf.mxu0
    %v840 = vadd.f32 0.0, %v839
    %841 = vdwg.mxu0
    %v842 = vld [vmem:[%s2] sm:$0xff]
    %v843 = vld [vmem:[%s2 + $0x8] sm:$0xff]
    %v844 = vld [vmem:[%s2 + $0x10] sm:$0xff]
    %v845 = vld [vmem:[%s2 + $0x18] sm:$0xff]
    %v846 = vld [vmem:[%s2 + $0x20] sm:$0xff]
    %v847 = vld [vmem:[%s2 + $0x28] sm:$0xff]
    %v848 = vld [vmem:[%s2 + $0x30] sm:$0xff]
    %v849 = vld [vmem:[%s2 + $0x38] sm:$0xff]
    %v851 = vsel %vm314, %v658, 0
    %853 = vmatpush.msra.mxu0 0.0
    %854 = vmatpush.msra.mxu0 0.0
    %855 = vmatpush.msra.mxu0 0.0
    %856 = vmatpush.msra.mxu0 0.0
    %857 = vmatpush.msra.mxu0 0.0
    %858 = vmatpush.msra.mxu0 0.0
    %859 = vmatpush.msra.mxu0 0.0
    %860 = vmatpush.msra.mxu0 0.0
    %861 = vmatpush.msra.mxu0 0.0
    %862 = vmatpush.msra.mxu0 0.0
    %863 = vmatpush.msra.mxu0 0.0
    %864 = vmatpush.msra.mxu0 0.0
    %865 = vmatpush.msra.mxu0 0.0
    %866 = vmatpush.msra.mxu0 0.0
    %867 = vmatpush.msra.mxu0 0.0
    %868 = vmatpush.msra.mxu0 %v842
    %869 = vmatmul.f32.gmra.mxu0 %v851
    %v870 = vpop.f32.mrf.mxu0
    %v871 = vadd.f32 0.0, %v870
    %872 = vdwg.mxu0
    %v874 = vsel %vm314, %v684, 0
    %876 = vmatpush.msra.mxu0 0.0
    %877 = vmatpush.msra.mxu0 0.0
    %878 = vmatpush.msra.mxu0 0.0
    %879 = vmatpush.msra.mxu0 0.0
    %880 = vmatpush.msra.mxu0 0.0
    %881 = vmatpush.msra.mxu0 0.0
    %882 = vmatpush.msra.mxu0 0.0
    %883 = vmatpush.msra.mxu0 0.0
    %884 = vmatpush.msra.mxu0 0.0
    %885 = vmatpush.msra.mxu0 0.0
    %886 = vmatpush.msra.mxu0 0.0
    %887 = vmatpush.msra.mxu0 0.0
    %888 = vmatpush.msra.mxu0 0.0
    %889 = vmatpush.msra.mxu0 0.0
    %890 = vmatpush.msra.mxu0 0.0
    %891 = vmatpush.msra.mxu0 %v843
    %892 = vmatmul.f32.gmra.mxu0 %v874
    %v893 = vpop.f32.mrf.mxu0
    %v894 = vadd.f32 0.0, %v893
    %895 = vdwg.mxu0
    %v897 = vsel %vm314, %v710, 0
    %899 = vmatpush.msra.mxu0 0.0
    %900 = vmatpush.msra.mxu0 0.0
    %901 = vmatpush.msra.mxu0 0.0
    %902 = vmatpush.msra.mxu0 0.0
    %903 = vmatpush.msra.mxu0 0.0
    %904 = vmatpush.msra.mxu0 0.0
    %905 = vmatpush.msra.mxu0 0.0
    %906 = vmatpush.msra.mxu0 0.0
    %907 = vmatpush.msra.mxu0 0.0
    %908 = vmatpush.msra.mxu0 0.0
    %909 = vmatpush.msra.mxu0 0.0
    %910 = vmatpush.msra.mxu0 0.0
    %911 = vmatpush.msra.mxu0 0.0
    %912 = vmatpush.msra.mxu0 0.0
    %913 = vmatpush.msra.mxu0 0.0
    %914 = vmatpush.msra.mxu0 %v844
    %915 = vmatmul.f32.gmra.mxu0 %v897
    %v916 = vpop.f32.mrf.mxu0
    %v917 = vadd.f32 0.0, %v916
    %918 = vdwg.mxu0
    %v920 = vsel %vm314, %v736, 0
    %922 = vmatpush.msra.mxu0 0.0
    %923 = vmatpush.msra.mxu0 0.0
    %924 = vmatpush.msra.mxu0 0.0
    %925 = vmatpush.msra.mxu0 0.0
    %926 = vmatpush.msra.mxu0 0.0
    %927 = vmatpush.msra.mxu0 0.0
    %928 = vmatpush.msra.mxu0 0.0
    %929 = vmatpush.msra.mxu0 0.0
    %930 = vmatpush.msra.mxu0 0.0
    %931 = vmatpush.msra.mxu0 0.0
    %932 = vmatpush.msra.mxu0 0.0
    %933 = vmatpush.msra.mxu0 0.0
    %934 = vmatpush.msra.mxu0 0.0
    %935 = vmatpush.msra.mxu0 0.0
    %936 = vmatpush.msra.mxu0 0.0
    %937 = vmatpush.msra.mxu0 %v845
    %938 = vmatmul.f32.gmra.mxu0 %v920
    %v939 = vpop.f32.mrf.mxu0
    %v940 = vadd.f32 0.0, %v939
    %941 = vdwg.mxu0
    %v943 = vsel %vm314, %v762, 0
    %945 = vmatpush.msra.mxu0 0.0
    %946 = vmatpush.msra.mxu0 0.0
    %947 = vmatpush.msra.mxu0 0.0
    %948 = vmatpush.msra.mxu0 0.0
    %949 = vmatpush.msra.mxu0 0.0
    %950 = vmatpush.msra.mxu0 0.0
    %951 = vmatpush.msra.mxu0 0.0
    %952 = vmatpush.msra.mxu0 0.0
    %953 = vmatpush.msra.mxu0 0.0
    %954 = vmatpush.msra.mxu0 0.0
    %955 = vmatpush.msra.mxu0 0.0
    %956 = vmatpush.msra.mxu0 0.0
    %957 = vmatpush.msra.mxu0 0.0
    %958 = vmatpush.msra.mxu0 0.0
    %959 = vmatpush.msra.mxu0 0.0
    %960 = vmatpush.msra.mxu0 %v846
    %961 = vmatmul.f32.gmra.mxu0 %v943
    %v962 = vpop.f32.mrf.mxu0
    %v963 = vadd.f32 0.0, %v962
    %964 = vdwg.mxu0
    %v966 = vsel %vm314, %v788, 0
    %968 = vmatpush.msra.mxu0 0.0
    %969 = vmatpush.msra.mxu0 0.0
    %970 = vmatpush.msra.mxu0 0.0
    %971 = vmatpush.msra.mxu0 0.0
    %972 = vmatpush.msra.mxu0 0.0
    %973 = vmatpush.msra.mxu0 0.0
    %974 = vmatpush.msra.mxu0 0.0
    %975 = vmatpush.msra.mxu0 0.0
    %976 = vmatpush.msra.mxu0 0.0
    %977 = vmatpush.msra.mxu0 0.0
    %978 = vmatpush.msra.mxu0 0.0
    %979 = vmatpush.msra.mxu0 0.0
    %980 = vmatpush.msra.mxu0 0.0
    %981 = vmatpush.msra.mxu0 0.0
    %982 = vmatpush.msra.mxu0 0.0
    %983 = vmatpush.msra.mxu0 %v847
    %984 = vmatmul.f32.gmra.mxu0 %v966
    %v985 = vpop.f32.mrf.mxu0
    %v986 = vadd.f32 0.0, %v985
    %987 = vdwg.mxu0
    %v989 = vsel %vm314, %v814, 0
    %991 = vmatpush.msra.mxu0 0.0
    %992 = vmatpush.msra.mxu0 0.0
    %993 = vmatpush.msra.mxu0 0.0
    %994 = vmatpush.msra.mxu0 0.0
    %995 = vmatpush.msra.mxu0 0.0
    %996 = vmatpush.msra.mxu0 0.0
    %997 = vmatpush.msra.mxu0 0.0
    %998 = vmatpush.msra.mxu0 0.0
    %999 = vmatpush.msra.mxu0 0.0
    %1000 = vmatpush.msra.mxu0 0.0
    %1001 = vmatpush.msra.mxu0 0.0
    %1002 = vmatpush.msra.mxu0 0.0
    %1003 = vmatpush.msra.mxu0 0.0
    %1004 = vmatpush.msra.mxu0 0.0
    %1005 = vmatpush.msra.mxu0 0.0
    %1006 = vmatpush.msra.mxu0 %v848
    %1007 = vmatmul.f32.gmra.mxu0 %v989
    %v1008 = vpop.f32.mrf.mxu0
    %v1009 = vadd.f32 0.0, %v1008
    %1010 = vdwg.mxu0
    %v1012 = vsel %vm314, %v840, 0
    %1014 = vmatpush.msra.mxu0 0.0
    %1015 = vmatpush.msra.mxu0 0.0
    %1016 = vmatpush.msra.mxu0 0.0
    %1017 = vmatpush.msra.mxu0 0.0
    %1018 = vmatpush.msra.mxu0 0.0
    %1019 = vmatpush.msra.mxu0 0.0
    %1020 = vmatpush.msra.mxu0 0.0
    %1021 = vmatpush.msra.mxu0 0.0
    %1022 = vmatpush.msra.mxu0 0.0
    %1023 = vmatpush.msra.mxu0 0.0
    %1024 = vmatpush.msra.mxu0 0.0
    %1025 = vmatpush.msra.mxu0 0.0
    %1026 = vmatpush.msra.mxu0 0.0
    %1027 = vmatpush.msra.mxu0 0.0
    %1028 = vmatpush.msra.mxu0 0.0
    %1029 = vmatpush.msra.mxu0 %v849
    %1030 = vmatmul.f32.gmra.mxu0 %v1012
    %v1031 = vpop.f32.mrf.mxu0
    %v1032 = vadd.f32 0.0, %v1031
    %1033 = vdwg.mxu0
    %v1034 = vsel %vm46, %v871, 0.0
    %v1035 = vsel %vm46, %v894, 0.0
    %v1036 = vadd.f32 %v1034, %v1035
    %v1037 = vsel %vm46, %v917, 0.0
    %v1038 = vadd.f32 %v1036, %v1037
    %v1039 = vsel %vm46, %v940, 0.0
    %v1040 = vadd.f32 %v1038, %v1039
    %v1041 = vsel %vm46, %v963, 0.0
    %v1042 = vsel %vm46, %v986, 0.0
    %v1043 = vadd.f32 %v1041, %v1042
    %v1044 = vsel %vm46, %v1009, 0.0
    %v1045 = vadd.f32 %v1043, %v1044
    %v1046 = vsel %vm46, %v1032, 0.0
    %v1047 = vadd.f32 %v1045, %v1046
    %v1048 = vld [vmem:[%s3] sm:$0x1]
    %v1050 = vperm.slane %v1048, 0
    %v1052 = vadd.f32 %v1040, %v1050
    %v1053 = vadd.f32 %v1047, %v1050
    %v1054 = vadd.f32 %v1052, %v42
    %v1055 = vadd.f32 %v1053, %v43
    %v1056 = vld [vmem:[%s10] sm:$0x1]
    %v1057 = vld [vmem:[%s11] sm:$0x1]
    %v1058 = vsel %vm46, %v1054, 0.0
    %1059 = vadd.xlane.f32.xlu0 %v1058
    %v1060 = vpop.xlane.xlu0 %1059
    %v1061 = vsel %vm46, %v1055, 0.0
    %1062 = vadd.xlane.f32.xlu0 %v1061
    %v1063 = vpop.xlane.xlu0 %1062
    %v1064 = vmul.f32 %v1060, %v59
    %v1065 = vmul.f32 %v1063, %v59
    %v1066 = vsub.f32 %v1054, %v1064
    %v1067 = vsub.f32 %v1055, %v1065
    %v1068 = vmul.f32 %v1066, %v1066
    %v1069 = vmul.f32 %v1067, %v1067
    %v1070 = vsel %vm46, %v1068, 0.0
    %1071 = vadd.xlane.f32.xlu0 %v1070
    %v1072 = vpop.xlane.xlu0 %1071
    %v1073 = vsel %vm46, %v1069, 0.0
    %1074 = vadd.xlane.f32.xlu0 %v1073
    %v1075 = vpop.xlane.xlu0 %1074
    %v1076 = vmul.f32 %v1072, %v59
    %v1077 = vmul.f32 %v1075, %v59
    %v1078 = vadd.f32 %v1076, 1e-05
    %v1079 = vadd.f32 %v1077, 1e-05
    %v1080 = vrsqrt.pop %v1078
    %v1081 = vmul.f32 %v1080, %v1078
    %v1082 = vmul.f32 %v1081, %v1080
    %v1083 = vmul.f32 0.5, %v1082
    %v1084 = vsub.f32 1.5, %v1083
    %v1085 = vmul.f32 %v1080, %v1084
    %vm1086 = vweird.f32 %v1078
    %vm1087 = vweird.f32 %v1080
    %vm1088 = vmor %vm1086, %vm1087
    %v1089 = vsel %vm1088, %v1080, %v1085
    %v1090 = vrsqrt.pop %v1079
    %v1091 = vmul.f32 %v1090, %v1079
    %v1092 = vmul.f32 %v1091, %v1090
    %v1093 = vmul.f32 0.5, %v1092
    %v1094 = vsub.f32 1.5, %v1093
    %v1095 = vmul.f32 %v1090, %v1094
    %vm1096 = vweird.f32 %v1079
    %vm1097 = vweird.f32 %v1090
    %vm1098 = vmor %vm1096, %vm1097
    %v1099 = vsel %vm1098, %v1090, %v1095
    %v1100 = vmul.f32 %v1066, %v1089
    %v1101 = vmul.f32 %v1067, %v1099
    %v1103 = vperm.slane %v1056, 0
    %v1105 = vmul.f32 %v1103, %v1100
    %v1106 = vmul.f32 %v1103, %v1101
    %v1108 = vperm.slane %v1057, 0
    %v1110 = vadd.f32 %v1105, %v1108
    %v1111 = vadd.f32 %v1106, %v1108
    %v1112 = vld [vmem:[%s4] sm:$0xff]
    %v1113 = vld [vmem:[%s4 + $0x8] sm:$0xff]
    %v1114 = vld [vmem:[%s4 + $0x10] sm:$0xff]
    %v1115 = vld [vmem:[%s4 + $0x18] sm:$0xff]
    %v1116 = vld [vmem:[%s5] sm:$0x1]
    %v1118 = vperm.slane %v1116, 0
    %v1121 = vsel %vm46, %v1110, 0
    %v1124 = vsel %vm46, %v1111, 0
    %1126 = vmatpush.msra.mxu0 0.0
    %1127 = vmatpush.msra.mxu0 0.0
    %1128 = vmatpush.msra.mxu0 0.0
    %1129 = vmatpush.msra.mxu0 0.0
    %1130 = vmatpush.msra.mxu0 0.0
    %1131 = vmatpush.msra.mxu0 0.0
    %1132 = vmatpush.msra.mxu0 0.0
    %1133 = vmatpush.msra.mxu0 0.0
    %1134 = vmatpush.msra.mxu0 0.0
    %1135 = vmatpush.msra.mxu0 0.0
    %1136 = vmatpush.msra.mxu0 0.0
    %1137 = vmatpush.msra.mxu0 0.0
    %1138 = vmatpush.msra.mxu0 %v1115
    %1139 = vmatpush.msra.mxu0 %v1114
    %1140 = vmatpush.msra.mxu0 %v1113
    %1141 = vmatpush.msra.mxu0 %v1112
    %1142 = vmatmul.f32.gmra.mxu0 %v1121
    %v1143 = vpop.f32.mrf.mxu0
    %v1144 = vadd.f32 %v1118, %v1143
    %1145 = vmatmul.f32.gmra.mxu0 %v1124
    %v1146 = vpop.f32.mrf.mxu0
    %v1147 = vadd.f32 %v1118, %v1146
    %1148 = vdwg.mxu0
    %v1149 = vmul.f32 %v1144, 0.5
    %v1150 = vmul.f32 %v1147, 0.5
    %v1151 = vmul.f32 %v1144, 0.044715
    %v1152 = vmul.f32 %v1147, 0.044715
    %v1153 = vmul.f32 %v1151, %v1144
    %v1154 = vmul.f32 %v1152, %v1147
    %v1155 = vmul.f32 %v1153, %v1144
    %v1156 = vmul.f32 %v1154, %v1147
    %v1157 = vadd.f32 %v1144, %v1155
    %v1158 = vadd.f32 %v1147, %v1156
    %v1159 = vmul.f32 %v1157, 0.7978846
    %v1160 = vmul.f32 %v1158, 0.7978846
    %v1161 = vtanh.pop %v1159
    %v1162 = vtanh.pop %v1160
    %v1163 = vadd.f32 %v1161, 1.0
    %v1164 = vadd.f32 %v1162, 1.0
    %v1165 = vmul.f32 %v1149, %v1163
    %v1166 = vmul.f32 %v1150, %v1164
    %v1167 = vld [vmem:[%s6] sm:$0xff]
    %v1168 = vld [vmem:[%s6 + $0x8] sm:$0xff]
    %v1169 = vld [vmem:[%s6 + $0x10] sm:$0xff]
    %v1170 = vld [vmem:[%s6 + $0x18] sm:$0xff]
    %v1171 = vld [vmem:[%s6 + $0x20] sm:$0xff]
    %v1172 = vld [vmem:[%s6 + $0x28] sm:$0xff]
    %v1173 = vld [vmem:[%s6 + $0x30] sm:$0xff]
    %v1174 = vld [vmem:[%s6 + $0x38] sm:$0xff]
    %v1175 = vld [vmem:[%s6 + $0x40] sm:$0xff]
    %v1176 = vld [vmem:[%s6 + $0x48] sm:$0xff]
    %v1177 = vld [vmem:[%s6 + $0x50] sm:$0xff]
    %v1178 = vld [vmem:[%s6 + $0x58] sm:$0xff]
    %v1179 = vld [vmem:[%s6 + $0x60] sm:$0xff]
    %v1180 = vld [vmem:[%s6 + $0x68] sm:$0xff]
    %v1181 = vld [vmem:[%s6 + $0x70] sm:$0xff]
    %v1182 = vld [vmem:[%s6 + $0x78] sm:$0xff]
    %v1183 = vld [vmem:[%s7] sm:$0x1]
    %v1185 = vperm.slane %v1183, 0
    %1187 = vmatpush.msra.mxu0 %v1182
    %1188 = vmatpush.msra.mxu0 %v1181
    %1189 = vmatpush.msra.mxu0 %v1180
    %1190 = vmatpush.msra.mxu0 %v1179
    %1191 = vmatpush.msra.mxu0 %v1178
    %1192 = vmatpush.msra.mxu0 %v1177
    %1193 = vmatpush.msra.mxu0 %v1176
    %1194 = vmatpush.msra.mxu0 %v1175
    %1195 = vmatpush.msra.mxu0 %v1174
    %1196 = vmatpush.msra.mxu0 %v1173
    %1197 = vmatpush.msra.mxu0 %v1172
    %1198 = vmatpush.msra.mxu0 %v1171
    %1199 = vmatpush.msra.mxu0 %v1170
    %1200 = vmatpush.msra.mxu0 %v1169
    %1201 = vmatpush.msra.mxu0 %v1168
    %1202 = vmatpush.msra.mxu0 %v1167
    %1203 = vmatmul.f32.gmra.mxu0 %v1165
    %v1204 = vpop.f32.mrf.mxu0
    %v1205 = vadd.f32 %v1185, %v1204
    %1206 = vmatmul.f32.gmra.mxu0 %v1166
    %v1207 = vpop.f32.mrf.mxu0
    %v1208 = vadd.f32 %v1185, %v1207
    %1209 = vdwg.mxu0
    %v1210 = vadd.f32 %v1205, %v1054
    %v1211 = vadd.f32 %v1208, %v1055
    %1212 = vst.msk [vmem:[#allocation2] sm:$0xff] %vm46, %v1210
    %1213 = vst.msk [vmem:[#allocation2 + $0x8] sm:$0xff] %vm46, %v1211
    // Predicated region
    $region50: #{tpu_custom_call.1} parent=1 // pred_check
      _
    $region51: #{tpu_custom_call.1} parent=1 // pred_check_branch
      %1215 = sbr.rel (0) target = $region53
    $region52: #{tpu_custom_call.1} parent=1 // pred_region
      %1217 = vsyncadd [#allocation3], 0
      %s1218 = sshll.u32 [#allocation2], 4
      %s1219 = int_to_ptr.vmem [resolvable:$true] %s1218
      %s1220 = sshll.u32 %s12, 4
      %s1221 = int_to_ptr.hbm [resolvable:$true] %s1220
      %1226 = dma.vmem_to_hbm [thread:$0]  %s1219, 256, %s1221, [#allocation3], 128, 128, 8
    $region53: #{tpu_custom_call.1} parent=1 // pred_fallthru
      _
    // Predicated region
    $region54: #{tpu_custom_call.1} parent=1 // pred_check
      _
    $region55: #{tpu_custom_call.1} parent=1 // pred_check_branch
      %1228 = sbr.rel (0) target = $region57
    $region56: #{tpu_custom_call.1} parent=1 // pred_region
      %1230 = dma.done [#allocation3], 256
    $region57: #{tpu_custom_call.1} parent=1 // pred_fallthru
      _
    %1231 = vsyncpa [#allocation3], 1

</llo_original>
